<compile_context>
chip_gen: v6e
topology: v6e:2x2x1
jax: 0.10.0
libtpu: 0.0.40
codegen_flags: <defaults>
</compile_context>

<pallas_src>
import functools

import jax
import jax.numpy as jnp
from jax import lax
from jax.experimental import pallas as pl
from jax.experimental.pallas import tpu as pltpu

_LANE = 128
_SUBLANE = 8


def _round_up(n, m):
    return ((n + m - 1) // m) * m


def _cdiv(a, b):
    return (a + b - 1) // b


def _associate_kernel(x_ref, vals_s_ref, vals_ref, zq_ref, *, beta, num_values,
                      chunk):
    """One (TILE_R, TILE_L) tile of the associative quantization.

    x_ref:      (TILE_R, TILE_L) f32  -- (padded / lane-folded) input rows
    vals_s_ref: (V, TILE_L)      f32  -- codebook * beta (transposed, lane-aligned)
    vals_ref:   (V, TILE_L)      f32  -- codebook       (transposed, lane-aligned)
    zq_ref:     (TILE_R, TILE_L) f32  -- quantized output tile
    """
    vals_s = vals_s_ref[...]                       # (V, TL) -- tiny, resident
    vals = vals_ref[...]                           # (V, TL)
    n_chunks = x_ref.shape[0] // chunk

    def body(c, carry):
        r0 = pl.multiple_of(c * chunk, chunk)
        # Scale x by beta once per chunk (beta pre-folded into vals_s).
        xs = x_ref[pl.ds(r0, chunk), :] * beta      # (chunk, TL)

        # Distances computed ONCE, kept in vregs (chunk sized so all fit).
        d = [jnp.abs(xs - vals_s[v:v + 1, :]) for v in range(num_values)]
        min_d = d[0]
        for v in range(1, num_values):
            min_d = jnp.minimum(min_d, d[v])

        # Shifted-softmax accumulation: exp arg <= 0, so den >= 1 always
        # (safe on the zero-padded rows/lanes too).
        num = jnp.zeros_like(xs)
        den = jnp.zeros_like(xs)
        for v in range(num_values):
            e = jnp.exp(min_d - d[v])               # EUP (free slot here)
            den = den + e
            num = num + e * vals[v:v + 1, :]

        # Approx reciprocal (EUP) + one Newton-Raphson step (~1e-6 rel error).
        inv = pl.reciprocal(den, approx=True)
        inv = inv * (2.0 - den * inv)
        zq_ref[pl.ds(r0, chunk), :] = num * inv
        return carry

    lax.fori_loop(0, n_chunks, body, 0, unroll=True)


def associative_latent_forward(x, values_per_latent, beta=100.0,
                               tile_rows=256, tile_lanes=256):
    """x: (B, L) float, values_per_latent: (L, V) float."""
    B, L = x.shape
    Lv, V = values_per_latent.shape
    assert L == Lv

    # Lane folding for small L: pack k = 128/L consecutive batch rows onto the
    # lane axis (codebook tiled k times) so every lane does useful work.
    k = _LANE // L if (L < _LANE and _LANE % L == 0) else 1
    L_work = L * k
    L_pad = _round_up(L_work, _LANE)

    R = _cdiv(B, k)                                  # folded row count
    R_pad8 = _round_up(max(R, 1), _SUBLANE)

    TILE_L = min(L_pad, _round_up(tile_lanes, _LANE))
    TILE_R = min(_round_up(max(tile_rows, _SUBLANE), _SUBLANE), R_pad8)
    if R_pad8 > _SUBLANE:
        # Keep >= 2 row blocks so ("parallel", ...) can shard across both
        # TensorCores on v7x.
        TILE_R = min(TILE_R, _round_up(_cdiv(R_pad8, 2), _SUBLANE))
    R_pad = _round_up(R_pad8, TILE_R)
    rows_needed = R_pad * k

    # --- pack the input: (B, L) -> (R_pad, L_pad); pads are no-ops when aligned.
    xf = x.astype(jnp.float32)
    if rows_needed != B:
        xf = jnp.pad(xf, ((0, rows_needed - B), (0, 0)))
    x_work = xf.reshape(R_pad, L_work) if k > 1 else xf
    if L_pad != L_work:
        x_work = jnp.pad(x_work, ((0, 0), (0, L_pad - L_work)))

    # --- codebook: transposed, lane-folded, lane-aligned; plus beta-scaled copy.
    vals_t = values_per_latent.astype(jnp.float32).T          # (V, L)
    if k > 1:
        vals_t = jnp.tile(vals_t, (1, k))                      # (V, L_work)
    if L_pad != L_work:
        vals_t = jnp.pad(vals_t, ((0, 0), (0, L_pad - L_work)))
    vals_s = vals_t * jnp.float32(beta)

    # Chunk sized so all V cached distances stay in vregs (~16-30 live vregs).
    chunk = 16 if (TILE_L <= _LANE and TILE_R % 16 == 0) else _SUBLANE

    grid = (R_pad // TILE_R, L_pad // TILE_L)
    kernel = functools.partial(_associate_kernel, beta=float(beta),
                               num_values=int(V), chunk=int(chunk))

    zq_p = pl.pallas_call(
        kernel,
        out_shape=jax.ShapeDtypeStruct((R_pad, L_pad), jnp.float32),
        grid=grid,
        in_specs=[
            pl.BlockSpec((TILE_R, TILE_L), lambda i, j: (i, j)),   # x tile
            pl.BlockSpec((V, TILE_L), lambda i, j: (0, j)),        # beta*codebook
            pl.BlockSpec((V, TILE_L), lambda i, j: (0, j)),        # codebook
        ],
        out_specs=pl.BlockSpec((TILE_R, TILE_L), lambda i, j: (i, j)),
        compiler_params=pltpu.CompilerParams(
            dimension_semantics=("parallel", "parallel"),
        ),
        cost_estimate=pl.CostEstimate(
            flops=10 * R_pad * L_pad * V,
            transcendentals=R_pad * L_pad * V,
            bytes_accessed=4 * (2 * R_pad * L_pad + 2 * V * L_pad),
        ),
    )(x_work, vals_s, vals_t)

    # --- unpack: (R_pad, L_pad) -> (B, L); slices are no-ops when aligned.
    if L_pad != L_work:
        zq_p = zq_p[:, :L_work]
    if k > 1:
        zq_p = zq_p.reshape(rows_needed, L)
    z_quantized = zq_p[:B, :] if rows_needed != B else zq_p

    # Straight-through estimator: value == z_quantized, gradient flows to x.
    z_hat = x + lax.stop_gradient(z_quantized - x)
    return {"z_continuous": x, "z_quantized": z_quantized, "z_hat": z_hat}


def make_values_per_latent(num_latents, num_values_per_latent):
    """Deterministic init identical to the PyTorch __init__ (linspace -1..1)."""
    if isinstance(num_values_per_latent, int):
        nvals = [num_values_per_latent] * num_latents
    else:
        nvals = list(num_values_per_latent)
    # The PyTorch module stacks the rows, which requires all counts equal.
    assert len(set(nvals)) == 1, "stacked parameter requires equal value counts"
    V = nvals[0]
    row = jnp.linspace(-1.0, 1.0, V, dtype=jnp.float32)
    return jnp.tile(row[None, :], (num_latents, 1))  # (L, V)


def _reference_forward(x, vals, beta):
    # Pure-JAX reference for correctness checking.
    d = jnp.abs(x[:, :, None] - vals[None, :, :])
    score = jax.nn.softmax(-d * beta, axis=-1)
    return jnp.sum(score * vals[None, :, :], axis=-1)


if __name__ == "__main__":
    B = 2            # batch
    L = 32           # num_latents
    V = 8            # num_values_per_latent
    beta = 100.0

    key = jax.random.PRNGKey(0)
    x = jax.random.normal(key, (B, L), dtype=jnp.float32)
    vals = make_values_per_latent(L, V)

    outs = associative_latent_forward(x, vals, beta=beta)
    jax.block_until_ready(outs["z_quantized"])

    # Sanity check against pure-JAX reference.
    ref_zq = _reference_forward(x, vals, beta)
    assert jnp.allclose(outs["z_quantized"], ref_zq, atol=2e-5, rtol=2e-5)
    assert jnp.allclose(outs["z_hat"], ref_zq, atol=2e-5, rtol=2e-5)
    assert jnp.allclose(outs["z_continuous"], x)

    # Exercise the multi-block / padded / lane-folded paths at other shapes.
    for (Bt, Lt, Vt) in ((64, 32, 8), (40, 200, 8)):
        kx = jax.random.fold_in(key, Bt * 1000 + Lt)
        xt = jax.random.normal(kx, (Bt, Lt), dtype=jnp.float32)
        vt = make_values_per_latent(Lt, Vt)
        o = associative_latent_forward(xt, vt, beta=beta)
        jax.block_until_ready(o["z_quantized"])
        rt = _reference_forward(xt, vt, beta)
        assert jnp.allclose(o["z_quantized"], rt, atol=2e-5, rtol=2e-5), (Bt, Lt)

    print("KERNEL_OK")
</pallas_src>

<mosaic_0001>
module attributes {stable_mosaic.version = 11 : i64} {
  func.func @_associate_kernel(%arg0: i32, %arg1: i32, %arg2: memref<8x128xf32, #tpu.memory_space<vmem>>, %arg3: memref<8x128xf32, #tpu.memory_space<vmem>>, %arg4: memref<8x128xf32, #tpu.memory_space<vmem>>, %arg5: memref<8x128xf32, #tpu.memory_space<vmem>>) attributes {dimension_semantics = [#tpu.dimension_semantics<parallel>, #tpu.dimension_semantics<parallel>], iteration_bounds = array<i64: 1, 1>, scalar_prefetch = 0 : i64, scratch_operands = 0 : i64, tpu.core_type = #tpu.core_type<tc>, window_params = [{transform_indices = @transform_0, window_bounds = array<i64: 8, 128>}, {transform_indices = @transform_1, window_bounds = array<i64: 8, 128>}, {transform_indices = @transform_2, window_bounds = array<i64: 8, 128>}, {transform_indices = @transform_3, window_bounds = array<i64: 8, 128>}]} {
    %c0 = arith.constant 0 : index
    %c0_0 = arith.constant 0 : index
    %0 = vector.load %arg3[%c0, %c0_0] : memref<8x128xf32, #tpu.memory_space<vmem>>, vector<8x128xf32>
    %c0_1 = arith.constant 0 : index
    %c0_2 = arith.constant 0 : index
    %1 = vector.load %arg4[%c0_1, %c0_2] : memref<8x128xf32, #tpu.memory_space<vmem>>, vector<8x128xf32>
    %c0_i32 = arith.constant 0 : i32
    %c8_i32 = arith.constant 8 : i32
    %2 = arith.muli %c0_i32, %c8_i32 : i32
    %3 = tpu.assume_multiple %2, 8 : i32
    %4 = arith.index_cast %3 : i32 to index
    %c0_3 = arith.constant 0 : index
    %5 = vector.load %arg2[%4, %c0_3] : memref<8x128xf32, #tpu.memory_space<vmem>>, vector<8x128xf32>
    %cst = arith.constant 1.000000e+02 : f32
    %6 = vector.broadcast %cst : f32 to vector<8x128xf32>
    %7 = arith.mulf %5, %6 : vector<8x128xf32>
    %8 = vector.extract_strided_slice %0 {offsets = [0, 0], sizes = [1, 128], strides = [1, 1]} : vector<8x128xf32> to vector<1x128xf32>
    %9 = vector.broadcast %8 : vector<1x128xf32> to vector<8x128xf32>
    %10 = arith.subf %7, %9 : vector<8x128xf32>
    %11 = math.absf %10 : vector<8x128xf32>
    %12 = vector.extract_strided_slice %0 {offsets = [1, 0], sizes = [1, 128], strides = [1, 1]} : vector<8x128xf32> to vector<1x128xf32>
    %13 = vector.broadcast %12 : vector<1x128xf32> to vector<8x128xf32>
    %14 = arith.subf %7, %13 : vector<8x128xf32>
    %15 = math.absf %14 : vector<8x128xf32>
    %16 = vector.extract_strided_slice %0 {offsets = [2, 0], sizes = [1, 128], strides = [1, 1]} : vector<8x128xf32> to vector<1x128xf32>
    %17 = vector.broadcast %16 : vector<1x128xf32> to vector<8x128xf32>
    %18 = arith.subf %7, %17 : vector<8x128xf32>
    %19 = math.absf %18 : vector<8x128xf32>
    %20 = vector.extract_strided_slice %0 {offsets = [3, 0], sizes = [1, 128], strides = [1, 1]} : vector<8x128xf32> to vector<1x128xf32>
    %21 = vector.broadcast %20 : vector<1x128xf32> to vector<8x128xf32>
    %22 = arith.subf %7, %21 : vector<8x128xf32>
    %23 = math.absf %22 : vector<8x128xf32>
    %24 = vector.extract_strided_slice %0 {offsets = [4, 0], sizes = [1, 128], strides = [1, 1]} : vector<8x128xf32> to vector<1x128xf32>
    %25 = vector.broadcast %24 : vector<1x128xf32> to vector<8x128xf32>
    %26 = arith.subf %7, %25 : vector<8x128xf32>
    %27 = math.absf %26 : vector<8x128xf32>
    %28 = vector.extract_strided_slice %0 {offsets = [5, 0], sizes = [1, 128], strides = [1, 1]} : vector<8x128xf32> to vector<1x128xf32>
    %29 = vector.broadcast %28 : vector<1x128xf32> to vector<8x128xf32>
    %30 = arith.subf %7, %29 : vector<8x128xf32>
    %31 = math.absf %30 : vector<8x128xf32>
    %32 = vector.extract_strided_slice %0 {offsets = [6, 0], sizes = [1, 128], strides = [1, 1]} : vector<8x128xf32> to vector<1x128xf32>
    %33 = vector.broadcast %32 : vector<1x128xf32> to vector<8x128xf32>
    %34 = arith.subf %7, %33 : vector<8x128xf32>
    %35 = math.absf %34 : vector<8x128xf32>
    %36 = vector.extract_strided_slice %0 {offsets = [7, 0], sizes = [1, 128], strides = [1, 1]} : vector<8x128xf32> to vector<1x128xf32>
    %37 = vector.broadcast %36 : vector<1x128xf32> to vector<8x128xf32>
    %38 = arith.subf %7, %37 : vector<8x128xf32>
    %39 = math.absf %38 : vector<8x128xf32>
    %40 = arith.minimumf %11, %15 : vector<8x128xf32>
    %41 = arith.minimumf %40, %19 : vector<8x128xf32>
    %42 = arith.minimumf %41, %23 : vector<8x128xf32>
    %43 = arith.minimumf %42, %27 : vector<8x128xf32>
    %44 = arith.minimumf %43, %31 : vector<8x128xf32>
    %45 = arith.minimumf %44, %35 : vector<8x128xf32>
    %46 = arith.minimumf %45, %39 : vector<8x128xf32>
    %cst_4 = arith.constant 0.000000e+00 : f32
    %47 = vector.broadcast %cst_4 : f32 to vector<8x128xf32>
    %cst_5 = arith.constant 0.000000e+00 : f32
    %48 = vector.broadcast %cst_5 : f32 to vector<8x128xf32>
    %49 = arith.subf %46, %11 : vector<8x128xf32>
    %50 = math.exp %49 : vector<8x128xf32>
    %51 = arith.addf %48, %50 : vector<8x128xf32>
    %52 = vector.extract_strided_slice %1 {offsets = [0, 0], sizes = [1, 128], strides = [1, 1]} : vector<8x128xf32> to vector<1x128xf32>
    %53 = vector.broadcast %52 : vector<1x128xf32> to vector<8x128xf32>
    %54 = arith.mulf %50, %53 : vector<8x128xf32>
    %55 = arith.addf %47, %54 : vector<8x128xf32>
    %56 = arith.subf %46, %15 : vector<8x128xf32>
    %57 = math.exp %56 : vector<8x128xf32>
    %58 = arith.addf %51, %57 : vector<8x128xf32>
    %59 = vector.extract_strided_slice %1 {offsets = [1, 0], sizes = [1, 128], strides = [1, 1]} : vector<8x128xf32> to vector<1x128xf32>
    %60 = vector.broadcast %59 : vector<1x128xf32> to vector<8x128xf32>
    %61 = arith.mulf %57, %60 : vector<8x128xf32>
    %62 = arith.addf %55, %61 : vector<8x128xf32>
    %63 = arith.subf %46, %19 : vector<8x128xf32>
    %64 = math.exp %63 : vector<8x128xf32>
    %65 = arith.addf %58, %64 : vector<8x128xf32>
    %66 = vector.extract_strided_slice %1 {offsets = [2, 0], sizes = [1, 128], strides = [1, 1]} : vector<8x128xf32> to vector<1x128xf32>
    %67 = vector.broadcast %66 : vector<1x128xf32> to vector<8x128xf32>
    %68 = arith.mulf %64, %67 : vector<8x128xf32>
    %69 = arith.addf %62, %68 : vector<8x128xf32>
    %70 = arith.subf %46, %23 : vector<8x128xf32>
    %71 = math.exp %70 : vector<8x128xf32>
    %72 = arith.addf %65, %71 : vector<8x128xf32>
    %73 = vector.extract_strided_slice %1 {offsets = [3, 0], sizes = [1, 128], strides = [1, 1]} : vector<8x128xf32> to vector<1x128xf32>
    %74 = vector.broadcast %73 : vector<1x128xf32> to vector<8x128xf32>
    %75 = arith.mulf %71, %74 : vector<8x128xf32>
    %76 = arith.addf %69, %75 : vector<8x128xf32>
    %77 = arith.subf %46, %27 : vector<8x128xf32>
    %78 = math.exp %77 : vector<8x128xf32>
    %79 = arith.addf %72, %78 : vector<8x128xf32>
    %80 = vector.extract_strided_slice %1 {offsets = [4, 0], sizes = [1, 128], strides = [1, 1]} : vector<8x128xf32> to vector<1x128xf32>
    %81 = vector.broadcast %80 : vector<1x128xf32> to vector<8x128xf32>
    %82 = arith.mulf %78, %81 : vector<8x128xf32>
    %83 = arith.addf %76, %82 : vector<8x128xf32>
    %84 = arith.subf %46, %31 : vector<8x128xf32>
    %85 = math.exp %84 : vector<8x128xf32>
    %86 = arith.addf %79, %85 : vector<8x128xf32>
    %87 = vector.extract_strided_slice %1 {offsets = [5, 0], sizes = [1, 128], strides = [1, 1]} : vector<8x128xf32> to vector<1x128xf32>
    %88 = vector.broadcast %87 : vector<1x128xf32> to vector<8x128xf32>
    %89 = arith.mulf %85, %88 : vector<8x128xf32>
    %90 = arith.addf %83, %89 : vector<8x128xf32>
    %91 = arith.subf %46, %35 : vector<8x128xf32>
    %92 = math.exp %91 : vector<8x128xf32>
    %93 = arith.addf %86, %92 : vector<8x128xf32>
    %94 = vector.extract_strided_slice %1 {offsets = [6, 0], sizes = [1, 128], strides = [1, 1]} : vector<8x128xf32> to vector<1x128xf32>
    %95 = vector.broadcast %94 : vector<1x128xf32> to vector<8x128xf32>
    %96 = arith.mulf %92, %95 : vector<8x128xf32>
    %97 = arith.addf %90, %96 : vector<8x128xf32>
    %98 = arith.subf %46, %39 : vector<8x128xf32>
    %99 = math.exp %98 : vector<8x128xf32>
    %100 = arith.addf %93, %99 : vector<8x128xf32>
    %101 = vector.extract_strided_slice %1 {offsets = [7, 0], sizes = [1, 128], strides = [1, 1]} : vector<8x128xf32> to vector<1x128xf32>
    %102 = vector.broadcast %101 : vector<1x128xf32> to vector<8x128xf32>
    %103 = arith.mulf %99, %102 : vector<8x128xf32>
    %104 = arith.addf %97, %103 : vector<8x128xf32>
    %105 = tpu.reciprocal %100 {approx = true} : vector<8x128xf32> -> vector<8x128xf32>
    %106 = arith.mulf %100, %105 : vector<8x128xf32>
    %cst_6 = arith.constant 2.000000e+00 : f32
    %107 = vector.broadcast %cst_6 : f32 to vector<8x128xf32>
    %108 = arith.subf %107, %106 : vector<8x128xf32>
    %109 = arith.mulf %105, %108 : vector<8x128xf32>
    %110 = arith.mulf %104, %109 : vector<8x128xf32>
    %111 = arith.index_cast %3 : i32 to index
    %c0_7 = arith.constant 0 : index
    %112 = vector.load %arg5[%111, %c0_7] : memref<8x128xf32, #tpu.memory_space<vmem>>, vector<8x128xf32>
    tpu.vector_store %arg5[%111, %c0_7], %110 {strides = array<i32>} : memref<8x128xf32, #tpu.memory_space<vmem>>, vector<8x128xf32>,
    %c1_i32 = arith.constant 1 : i32
    return
  }
  func.func @transform_0(%arg0: i32, %arg1: i32) -> (i32, i32) {
    %c0_i32 = arith.constant 0 : i32
    return %arg0, %arg1 : i32, i32
  }
  func.func @transform_1(%arg0: i32, %arg1: i32) -> (i32, i32) {
    %c0_i32 = arith.constant 0 : i32
    %c0_i32_0 = arith.constant 0 : i32
    return %c0_i32, %arg1 : i32, i32
  }
  func.func @transform_2(%arg0: i32, %arg1: i32) -> (i32, i32) {
    %c0_i32 = arith.constant 0 : i32
    %c0_i32_0 = arith.constant 0 : i32
    return %c0_i32, %arg1 : i32, i32
  }
  func.func @transform_3(%arg0: i32, %arg1: i32) -> (i32, i32) {
    %c0_i32 = arith.constant 0 : i32
    return %arg0, %arg1 : i32, i32
  }
}

</mosaic_0001>

<llo_original>
// kernel: tpu_custom_call.1
$region0: #{tpu_custom_call.1}
  #allocation0 [shape = 'u32[]', space=smem, size = 0x4, offset = 0x4, fixed_abs, tag = 'smem constant byte address 0x4 - core index']
  #allocation1 [shape = 'u32[144,128]{1,0:T(1,128)}', space=vmem, size = 0x12000, scoped, tag = 'internal scratch']
  %s0 = inlined_call_operand.hbm [shape: f32[8,128], index: 0, kind: input, shape index: {}]
  %s1 = inlined_call_operand.hbm [shape: f32[8,128], index: 1, kind: input, shape index: {}]
  %s2 = inlined_call_operand.hbm [shape: f32[8,128], index: 2, kind: input, shape index: {}]
  %s3 = inlined_call_operand.hbm [shape: f32[8,128], index: 3, kind: output, shape index: {}]
  %s4 = sld [smem:[#allocation0]]
  $region34: #{tpu_custom_call.1} parent=0
    _
  %s6 = ssub.s32 1, %s4
  %s7 = scalar_select 0, %s6, %s4
  $region1: #{tpu_custom_call.1} parent=0
    #allocation2 [shape = 'u8[4096]{0}', space=vmem, size = 0x1000, scoped, tag = 'input window, operand 0, single buffered']
    #allocation3 [shape = 's32[1]{0}', space=sflag, size = 0x4, scoped, tag = 'scoped memory for tpu_custom_call.1']
    #allocation4 [shape = 's32[1]{0}', space=sflag, size = 0x4, scoped, tag = 'scoped memory for tpu_custom_call.1']
    #allocation5 [shape = 'u8[4096]{0}', space=vmem, size = 0x1000, scoped, tag = 'input window, operand 1, single buffered']
    #allocation6 [shape = 's32[1]{0}', space=sflag, size = 0x4, scoped, tag = 'scoped memory for tpu_custom_call.1']
    #allocation7 [shape = 'u8[4096]{0}', space=vmem, size = 0x1000, scoped, tag = 'input window, operand 2, single buffered']
    #allocation8 [shape = 'u8[4096]{0}', space=vmem, size = 0x1000, scoped, tag = 'output window, operand 0, single buffered']
    %8 = vsyncpa [#allocation3], 0
    %9 = vsyncpa [#allocation6], 0
    %10 = vsyncpa [#allocation4], 0
    // Predicated region
    $region2: #{tpu_custom_call.1} parent=1 // pred_check
      _
    $region3: #{tpu_custom_call.1} parent=1 // pred_check_branch
      %12 = sbr.rel (0) target = $region5
    $region4: #{tpu_custom_call.1} parent=1 // pred_region
      %s14 = ssub.s32 128, 128
      %15 = vsyncadd [#allocation3], %s14
      %s17 = sshll.u32 [#allocation2], 4
      %s18 = int_to_ptr.vmem [resolvable:$true] %s17
      %20 = dma.hbm_to_vmem [thread:$0]  %s0, 128, %s18, [#allocation3]
    $region5: #{tpu_custom_call.1} parent=1 // pred_fallthru
      _
    // Predicated region
    $region6: #{tpu_custom_call.1} parent=1 // pred_check
      _
    $region7: #{tpu_custom_call.1} parent=1 // pred_check_branch
      %22 = sbr.rel (0) target = $region9
    $region8: #{tpu_custom_call.1} parent=1 // pred_region
      %s24 = ssub.s32 128, 128
      %25 = vsyncadd [#allocation6], %s24
      %s27 = sshll.u32 [#allocation5], 4
      %s28 = int_to_ptr.vmem [resolvable:$true] %s27
      %30 = dma.hbm_to_vmem [thread:$0]  %s1, 128, %s28, [#allocation6]
    $region9: #{tpu_custom_call.1} parent=1 // pred_fallthru
      _
    // Predicated region
    $region10: #{tpu_custom_call.1} parent=1 // pred_check
      _
    $region11: #{tpu_custom_call.1} parent=1 // pred_check_branch
      %32 = sbr.rel (0) target = $region13
    $region12: #{tpu_custom_call.1} parent=1 // pred_region
      %s34 = ssub.s32 128, 128
      %35 = vsyncadd [#allocation6], %s34
      %s37 = sshll.u32 [#allocation7], 4
      %s38 = int_to_ptr.vmem [resolvable:$true] %s37
      %40 = dma.hbm_to_vmem [thread:$0]  %s2, 128, %s38, [#allocation6]
    $region13: #{tpu_custom_call.1} parent=1 // pred_fallthru
      _
    // Predicated region
    $region14: #{tpu_custom_call.1} parent=1 // pred_check
      _
    $region15: #{tpu_custom_call.1} parent=1 // pred_check_branch
      %42 = sbr.rel (0) target = $region17
    $region16: #{tpu_custom_call.1} parent=1 // pred_region
      %43 = dma.done [#allocation3], 128
    $region17: #{tpu_custom_call.1} parent=1 // pred_fallthru
      _
    // Predicated region
    $region18: #{tpu_custom_call.1} parent=1 // pred_check
      _
    $region19: #{tpu_custom_call.1} parent=1 // pred_check_branch
      %45 = sbr.rel (0) target = $region21
    $region20: #{tpu_custom_call.1} parent=1 // pred_region
      %46 = dma.done [#allocation6], 128
    $region21: #{tpu_custom_call.1} parent=1 // pred_fallthru
      _
    // Predicated region
    $region22: #{tpu_custom_call.1} parent=1 // pred_check
      _
    $region23: #{tpu_custom_call.1} parent=1 // pred_check_branch
      %48 = sbr.rel (0) target = $region25
    $region24: #{tpu_custom_call.1} parent=1 // pred_region
      %49 = dma.done [#allocation6], 128
    $region25: #{tpu_custom_call.1} parent=1 // pred_fallthru
      _
    %v50 = vld [vmem:[#allocation5] sm:$0xff]
    %v51 = vld [vmem:[#allocation7] sm:$0xff]
    %v52 = vld [vmem:[#allocation2] sm:$0xff]
    %v53 = vmul.f32 %v52, 100.0
    %v54 = vlaneseq
    %v55 = vshrl.u32 %v54, 7
    %v56 = vsub.s32 0, %v55
    %v57 = vrot.slane %v50, %v56
    %v58 = vsub.f32 %v53, %v57
    %v59 = vand.u32 2147483647, %v58
    %v60 = vlaneseq
    %v61 = vshrl.u32 %v60, 7
    %v62 = vsub.s32 1, %v61
    %v63 = vrot.slane %v50, %v62
    %v64 = vsub.f32 %v53, %v63
    %v65 = vand.u32 2147483647, %v64
    %v66 = vlaneseq
    %v67 = vshrl.u32 %v66, 7
    %v68 = vsub.s32 2, %v67
    %v69 = vrot.slane %v50, %v68
    %v70 = vsub.f32 %v53, %v69
    %v71 = vand.u32 2147483647, %v70
    %v72 = vlaneseq
    %v73 = vshrl.u32 %v72, 7
    %v74 = vsub.s32 3, %v73
    %v75 = vrot.slane %v50, %v74
    %v76 = vsub.f32 %v53, %v75
    %v77 = vand.u32 2147483647, %v76
    %v78 = vlaneseq
    %v79 = vshrl.u32 %v78, 7
    %v80 = vsub.s32 4, %v79
    %v81 = vrot.slane %v50, %v80
    %v82 = vsub.f32 %v53, %v81
    %v83 = vand.u32 2147483647, %v82
    %v84 = vlaneseq
    %v85 = vshrl.u32 %v84, 7
    %v86 = vsub.s32 5, %v85
    %v87 = vrot.slane %v50, %v86
    %v88 = vsub.f32 %v53, %v87
    %v89 = vand.u32 2147483647, %v88
    %v90 = vlaneseq
    %v91 = vshrl.u32 %v90, 7
    %v92 = vsub.s32 6, %v91
    %v93 = vrot.slane %v50, %v92
    %v94 = vsub.f32 %v53, %v93
    %v95 = vand.u32 2147483647, %v94
    %v96 = vlaneseq
    %v97 = vshrl.u32 %v96, 7
    %v98 = vsub.s32 7, %v97
    %v99 = vrot.slane %v50, %v98
    %v100 = vsub.f32 %v53, %v99
    %v101 = vand.u32 2147483647, %v100
    %v102 = vmin.f32 %v59, %v65
    %v103 = vmin.f32 %v102, %v71
    %v104 = vmin.f32 %v103, %v77
    %v105 = vmin.f32 %v104, %v83
    %v106 = vmin.f32 %v105, %v89
    %v107 = vmin.f32 %v106, %v95
    %v108 = vmin.f32 %v107, %v101
    %v109 = vsub.f32 %v108, %v59
    %v110 = vmul.f32 %v109, 1.442695
    %v111 = vpow.pop %v110
    %v112 = vadd.f32 %v111, 0.0
    %v113 = vlaneseq
    %v114 = vshrl.u32 %v113, 7
    %v115 = vsub.s32 0, %v114
    %v116 = vrot.slane %v51, %v115
    %v117 = vmul.f32 %v111, %v116
    %v118 = vadd.f32 %v117, 0.0
    %v119 = vsub.f32 %v108, %v65
    %v120 = vmul.f32 %v119, 1.442695
    %v121 = vpow.pop %v120
    %v122 = vadd.f32 %v112, %v121
    %v123 = vlaneseq
    %v124 = vshrl.u32 %v123, 7
    %v125 = vsub.s32 1, %v124
    %v126 = vrot.slane %v51, %v125
    %v127 = vmul.f32 %v121, %v126
    %v128 = vadd.f32 %v118, %v127
    %v129 = vsub.f32 %v108, %v71
    %v130 = vmul.f32 %v129, 1.442695
    %v131 = vpow.pop %v130
    %v132 = vadd.f32 %v122, %v131
    %v133 = vlaneseq
    %v134 = vshrl.u32 %v133, 7
    %v135 = vsub.s32 2, %v134
    %v136 = vrot.slane %v51, %v135
    %v137 = vmul.f32 %v131, %v136
    %v138 = vadd.f32 %v128, %v137
    %v139 = vsub.f32 %v108, %v77
    %v140 = vmul.f32 %v139, 1.442695
    %v141 = vpow.pop %v140
    %v142 = vadd.f32 %v132, %v141
    %v143 = vlaneseq
    %v144 = vshrl.u32 %v143, 7
    %v145 = vsub.s32 3, %v144
    %v146 = vrot.slane %v51, %v145
    %v147 = vmul.f32 %v141, %v146
    %v148 = vadd.f32 %v138, %v147
    %v149 = vsub.f32 %v108, %v83
    %v150 = vmul.f32 %v149, 1.442695
    %v151 = vpow.pop %v150
    %v152 = vadd.f32 %v142, %v151
    %v153 = vlaneseq
    %v154 = vshrl.u32 %v153, 7
    %v155 = vsub.s32 4, %v154
    %v156 = vrot.slane %v51, %v155
    %v157 = vmul.f32 %v151, %v156
    %v158 = vadd.f32 %v148, %v157
    %v159 = vsub.f32 %v108, %v89
    %v160 = vmul.f32 %v159, 1.442695
    %v161 = vpow.pop %v160
    %v162 = vadd.f32 %v152, %v161
    %v163 = vlaneseq
    %v164 = vshrl.u32 %v163, 7
    %v165 = vsub.s32 5, %v164
    %v166 = vrot.slane %v51, %v165
    %v167 = vmul.f32 %v161, %v166
    %v168 = vadd.f32 %v158, %v167
    %v169 = vsub.f32 %v108, %v95
    %v170 = vmul.f32 %v169, 1.442695
    %v171 = vpow.pop %v170
    %v172 = vadd.f32 %v162, %v171
    %v173 = vlaneseq
    %v174 = vshrl.u32 %v173, 7
    %v175 = vsub.s32 6, %v174
    %v176 = vrot.slane %v51, %v175
    %v177 = vmul.f32 %v171, %v176
    %v178 = vadd.f32 %v168, %v177
    %v179 = vsub.f32 %v108, %v101
    %v180 = vmul.f32 %v179, 1.442695
    %v181 = vpow.pop %v180
    %v182 = vadd.f32 %v172, %v181
    %v183 = vlaneseq
    %v184 = vshrl.u32 %v183, 7
    %v185 = vsub.s32 7, %v184
    %v186 = vrot.slane %v51, %v185
    %v187 = vmul.f32 %v181, %v186
    %v188 = vadd.f32 %v178, %v187
    %v189 = vrcp.pop %v182
    %v190 = vmul.f32 %v182, %v189
    %v191 = vsub.f32 2.0, %v190
    %v192 = vmul.f32 %v189, %v191
    %v193 = vmul.f32 %v188, %v192
    %194 = vst [vmem:[#allocation8] sm:$0xff] %v193
    // Predicated region
    $region26: #{tpu_custom_call.1} parent=1 // pred_check
      _
    $region27: #{tpu_custom_call.1} parent=1 // pred_check_branch
      %196 = sbr.rel (0) target = $region29
    $region28: #{tpu_custom_call.1} parent=1 // pred_region
      %s198 = ssub.s32 128, 128
      %199 = vsyncadd [#allocation4], %s198
      %s201 = sshll.u32 [#allocation8], 4
      %s202 = int_to_ptr.vmem [resolvable:$true] %s201
      %204 = dma.vmem_to_hbm [thread:$0]  %s202, 128, %s3, [#allocation4]
    $region29: #{tpu_custom_call.1} parent=1 // pred_fallthru
      _
    // Predicated region
    $region30: #{tpu_custom_call.1} parent=1 // pred_check
      _
    $region31: #{tpu_custom_call.1} parent=1 // pred_check_branch
      %206 = sbr.rel (0) target = $region33
    $region32: #{tpu_custom_call.1} parent=1 // pred_region
      %207 = dma.done [#allocation4], 128
    $region33: #{tpu_custom_call.1} parent=1 // pred_fallthru
      _
    %208 = vsyncpa [#allocation3], 1
    %209 = vsyncpa [#allocation6], 1
    %210 = vsyncpa [#allocation4], 1

</llo_original>
